<compile_context>
chip_gen: v7x
topology: tpu7x:2x2x1
jax: 0.10.0
libtpu: 0.0.40
codegen_flags: <defaults>
</compile_context>

<pallas_src>
import jax
import jax.numpy as jnp
from jax.experimental import pallas as pl
from jax.experimental.pallas import tpu as pltpu


def _round_up(n, m):
    return ((n + m - 1) // m) * m


def policy_kernel(x_ref, w1_ref, b1_ref, w2_ref, b2_ref, o_ref):
    # fc1 + ReLU. x arrives f32 from HBM; cast to the weight dtype (bf16) in
    # VMEM so the MXU runs at its native rate, accumulate in f32.
    x = x_ref[...].astype(w1_ref.dtype)
    h = jnp.dot(x, w1_ref[...], preferred_element_type=jnp.float32) + b1_ref[...]
    h = jnp.maximum(h, 0.0)
    # fc2 (padded action columns carry a -1e30 f32 bias -> softmax weight 0).
    logits = (jnp.dot(h.astype(w2_ref.dtype), w2_ref[...],
                      preferred_element_type=jnp.float32) + b2_ref[...])
    # Numerically stable softmax over the lane-dense padded action axis (f32).
    m = jnp.max(logits, axis=-1, keepdims=True)
    e = jnp.exp(logits - m)
    denom = jnp.sum(e, axis=-1, keepdims=True)
    # Approx reciprocal on the EUP + one Newton step for full f32 accuracy.
    r = pl.reciprocal(denom, approx=True)
    r = r * (2.0 - denom * r)
    o_ref[...] = (e * r).astype(o_ref.dtype)


def prepare_params(w1, b1, w2, b2, *, param_dtype=jnp.bfloat16):
    """One-time (hoisted) padding + cast of the parameters.

    w1: (input, hidden), b1: (1, hidden), w2: (hidden, action), b2: (1, action).
    Hidden/action dims are padded to multiples of 128 (lane/MXU alignment); the
    input (contraction) dim of w1 is left unpadded. Padded action columns get a
    -1e30 bias so the softmax ignores them. Weights are cast to `param_dtype`
    (bf16 by default); biases stay f32.
    """
    in_size, hidden = w1.shape
    act = w2.shape[1]
    hid_p = _round_up(hidden, 128)
    act_p = _round_up(act, 128)

    w1_p = jnp.zeros((in_size, hid_p), param_dtype).at[:, :hidden].set(
        w1.astype(param_dtype))
    b1_p = jnp.zeros((1, hid_p), jnp.float32).at[:, :hidden].set(
        b1.astype(jnp.float32))
    w2_p = jnp.zeros((hid_p, act_p), param_dtype).at[:hidden, :act].set(
        w2.astype(param_dtype))
    b2_p = jnp.full((1, act_p), -1e30, jnp.float32).at[:, :act].set(
        b2.astype(jnp.float32))
    return w1_p, b1_p, w2_p, b2_p, act


def policy_forward(x, params, *, block_b=128):
    """softmax(relu(x @ w1 + b1) @ w2 + b2) using pre-prepared padded params.

    x: (B, input_size) f32. params: output of prepare_params().
    For single-TC chips (v5e/v6e) with large batches, raising block_b to
    256-512 amortizes the per-grid-step overhead.
    """
    w1_p, b1_p, w2_p, b2_p, act = params
    B, in_size = x.shape
    act_p = w2_p.shape[1]

    # Batch tile: multiple of 8 (sublane), capped at block_b; prefer >=2 grid
    # steps when the batch allows it so v7x's two TensorCores both get work.
    b8 = _round_up(B, 8)
    tb = min(block_b, b8)
    if tb == b8 and b8 >= 16:
        tb = _round_up(b8 // 2, 8)
    b_pad = _round_up(B, tb)

    # Only batch-dim padding of x (and only when needed); no lane padding in HBM.
    if b_pad != B:
        x_in = jnp.zeros((b_pad, in_size), x.dtype).at[:B].set(x)
    else:
        x_in = x

    # Explicit VMEM budget: resident weights (single-buffered) + double-buffered
    # x/out tiles + headroom for compiler-internal scratch.
    weight_bytes = sum(int(a.size) * a.dtype.itemsize
                       for a in (w1_p, b1_p, w2_p, b2_p))
    io_bytes = 2 * (tb * in_size * x.dtype.itemsize + tb * act_p * 4)
    vmem_limit = int(min(128 * 1024 * 1024, weight_bytes + io_bytes + (16 << 20)))

    grid = (b_pad // tb,)
    out = pl.pallas_call(
        policy_kernel,
        out_shape=jax.ShapeDtypeStruct((b_pad, act_p), jnp.float32),
        grid_spec=pltpu.PrefetchScalarGridSpec(
            num_scalar_prefetch=0,
            grid=grid,
            in_specs=[
                # x: streamed per batch tile (pipelined); last dim = full array
                # dim (no lane padding in HBM).
                pl.BlockSpec((tb, in_size), lambda i: (i, 0)),
                # Weights / biases: untiled, copied once into VMEM and resident
                # across the whole grid (single buffer -> half the footprint of
                # a double-buffered constant-index block; v7x-friendly).
                pl.BlockSpec(memory_space=pltpu.MemorySpace.VMEM),
                pl.BlockSpec(memory_space=pltpu.MemorySpace.VMEM),
                pl.BlockSpec(memory_space=pltpu.MemorySpace.VMEM),
                pl.BlockSpec(memory_space=pltpu.MemorySpace.VMEM),
            ],
            out_specs=pl.BlockSpec((tb, act_p), lambda i: (i, 0)),
        ),
        compiler_params=pltpu.CompilerParams(
            dimension_semantics=("parallel",),
            vmem_limit_bytes=vmem_limit,
        ),
    )(x_in, w1_p, b1_p, w2_p, b2_p)

    return out[:B, :act]


def init_params(key, input_size, hidden_size, action_size):
    # Deterministic init mimicking nn.Linear's uniform(-1/sqrt(fan_in), +).
    k1, k2, k3, k4 = jax.random.split(key, 4)
    bound1 = 1.0 / jnp.sqrt(input_size)
    bound2 = 1.0 / jnp.sqrt(hidden_size)
    # Stored already transposed to (in, out) layout for the kernel.
    w1 = jax.random.uniform(k1, (input_size, hidden_size), jnp.float32, -bound1, bound1)
    b1 = jax.random.uniform(k2, (1, hidden_size), jnp.float32, -bound1, bound1)
    w2 = jax.random.uniform(k3, (hidden_size, action_size), jnp.float32, -bound2, bound2)
    b2 = jax.random.uniform(k4, (1, action_size), jnp.float32, -bound2, bound2)
    return w1, b1, w2, b2


def policy_ref(x, w1, b1, w2, b2, dtype=jnp.float32):
    """Pure-JAX reference; `dtype` lets us mirror the kernel's bf16 matmul inputs."""
    h = jnp.dot(x.astype(dtype), w1.astype(dtype),
                preferred_element_type=jnp.float32) + b1
    h = jnp.maximum(h, 0.0)
    logits = jnp.dot(h.astype(dtype), w2.astype(dtype),
                     preferred_element_type=jnp.float32) + b2
    return jax.nn.softmax(logits, axis=1)


if __name__ == "__main__":
    input_size, hidden_size, action_size = 16, 32, 4
    batch = 8

    key = jax.random.PRNGKey(0)
    kx, kp = jax.random.split(key)
    x = jax.random.normal(kx, (batch, input_size), jnp.float32)
    w1, b1, w2, b2 = init_params(kp, input_size, hidden_size, action_size)

    # One-time parameter preparation (padding + bf16 cast), hoisted out of the
    # per-call path.
    params = prepare_params(w1, b1, w2, b2, param_dtype=jnp.bfloat16)

    out = policy_forward(x, params)
    out = jax.block_until_ready(out)
    assert out.shape == (batch, action_size)

    # Matches a reference that uses the same bf16 matmul inputs (f32 accumulate).
    ref_bf16 = policy_ref(x, w1, b1, w2, b2, dtype=jnp.bfloat16)
    assert jnp.allclose(out, ref_bf16, atol=1e-4, rtol=1e-4)
    # Close to the full-f32 PyTorch-equivalent forward (bf16 weight rounding).
    ref_f32 = policy_ref(x, w1, b1, w2, b2, dtype=jnp.float32)
    assert jnp.allclose(out, ref_f32, atol=5e-2)
    # Valid probability distribution per row.
    assert jnp.allclose(jnp.sum(out, axis=1), 1.0, atol=1e-5)

    print("KERNEL_OK")
</pallas_src>

<mosaic_0001>
module attributes {stable_mosaic.version = 11 : i64} {
  func.func @policy_kernel(%arg0: i32, %arg1: memref<8x16xf32, #tpu.memory_space<vmem>>, %arg2: memref<16x128xbf16, #tpu.memory_space<vmem>>, %arg3: memref<1x128xf32, #tpu.memory_space<vmem>>, %arg4: memref<128x128xbf16, #tpu.memory_space<vmem>>, %arg5: memref<1x128xf32, #tpu.memory_space<vmem>>, %arg6: memref<8x128xf32, #tpu.memory_space<vmem>>) attributes {dimension_semantics = [#tpu.dimension_semantics<parallel>], iteration_bounds = array<i64: 1>, scalar_prefetch = 0 : i64, scratch_operands = 0 : i64, tpu.core_type = #tpu.core_type<tc>, window_params = [{transform_indices = @transform_0, window_bounds = array<i64: 8, 16>}, {pipeline_mode = #tpu.pipeline_mode<synchronous>, transform_indices = @transform_1, window_bounds = array<i64: 16, 128>}, {pipeline_mode = #tpu.pipeline_mode<synchronous>, transform_indices = @transform_2, window_bounds = array<i64: 1, 128>}, {pipeline_mode = #tpu.pipeline_mode<synchronous>, transform_indices = @transform_3, window_bounds = array<i64: 128, 128>}, {pipeline_mode = #tpu.pipeline_mode<synchronous>, transform_indices = @transform_4, window_bounds = array<i64: 1, 128>}, {transform_indices = @transform_5, window_bounds = array<i64: 8, 128>}]} {
    %c0 = arith.constant 0 : index
    %c0_0 = arith.constant 0 : index
    %0 = vector.load %arg1[%c0, %c0_0] : memref<8x16xf32, #tpu.memory_space<vmem>>, vector<8x16xf32>
    %1 = arith.truncf %0 : vector<8x16xf32> to vector<8x16xbf16>
    %c0_1 = arith.constant 0 : index
    %c0_2 = arith.constant 0 : index
    %2 = vector.load %arg2[%c0_1, %c0_2] : memref<16x128xbf16, #tpu.memory_space<vmem>>, vector<16x128xbf16>
    %cst = arith.constant dense<0.000000e+00> : vector<8x128xf32>
    %3 = tpu.matmul %1, %2, %cst {dimension_numbers = #tpu.dot_dimension_numbers<[1], [0], [0], [1], [0, 0, 1, 1], [], []>} : vector<8x16xbf16>, vector<16x128xbf16>, vector<8x128xf32> -> vector<8x128xf32>
    %c0_3 = arith.constant 0 : index
    %c0_4 = arith.constant 0 : index
    %4 = vector.load %arg3[%c0_3, %c0_4] : memref<1x128xf32, #tpu.memory_space<vmem>>, vector<1x128xf32>
    %5 = vector.broadcast %4 : vector<1x128xf32> to vector<8x128xf32>
    %6 = arith.addf %3, %5 : vector<8x128xf32>
    %cst_5 = arith.constant 0.000000e+00 : f32
    %7 = vector.broadcast %cst_5 : f32 to vector<8x128xf32>
    %8 = arith.maximumf %6, %7 : vector<8x128xf32>
    %9 = arith.truncf %8 : vector<8x128xf32> to vector<8x128xbf16>
    %c0_6 = arith.constant 0 : index
    %c0_7 = arith.constant 0 : index
    %10 = vector.load %arg4[%c0_6, %c0_7] : memref<128x128xbf16, #tpu.memory_space<vmem>>, vector<128x128xbf16>
    %cst_8 = arith.constant dense<0.000000e+00> : vector<8x128xf32>
    %11 = tpu.matmul %9, %10, %cst_8 {dimension_numbers = #tpu.dot_dimension_numbers<[1], [0], [0], [1], [0, 0, 1, 1], [], []>} : vector<8x128xbf16>, vector<128x128xbf16>, vector<8x128xf32> -> vector<8x128xf32>
    %c0_9 = arith.constant 0 : index
    %c0_10 = arith.constant 0 : index
    %12 = vector.load %arg5[%c0_9, %c0_10] : memref<1x128xf32, #tpu.memory_space<vmem>>, vector<1x128xf32>
    %13 = vector.broadcast %12 : vector<1x128xf32> to vector<8x128xf32>
    %14 = arith.addf %11, %13 : vector<8x128xf32>
    %cst_11 = arith.constant dense<0xFF800000> : vector<8xf32>
    %15 = vector.multi_reduction <maximumf>, %14, %cst_11 [1] : vector<8x128xf32> to vector<8xf32>
    %16 = vector.shape_cast %15 : vector<8xf32> to vector<8x1xf32>
    %17 = vector.broadcast %16 : vector<8x1xf32> to vector<8x128xf32>
    %18 = arith.subf %14, %17 : vector<8x128xf32>
    %19 = math.exp %18 : vector<8x128xf32>
    %cst_12 = arith.constant dense<0.000000e+00> : vector<8xf32>
    %20 = vector.multi_reduction <add>, %19, %cst_12 [1] : vector<8x128xf32> to vector<8xf32>
    %21 = vector.shape_cast %20 : vector<8xf32> to vector<8x1xf32>
    %22 = tpu.reciprocal %21 {approx = true} : vector<8x1xf32> -> vector<8x1xf32>
    %23 = arith.mulf %21, %22 : vector<8x1xf32>
    %cst_13 = arith.constant 2.000000e+00 : f32
    %24 = vector.broadcast %cst_13 : f32 to vector<8x1xf32>
    %25 = arith.subf %24, %23 : vector<8x1xf32>
    %26 = arith.mulf %22, %25 : vector<8x1xf32>
    %27 = vector.broadcast %26 : vector<8x1xf32> to vector<8x128xf32>
    %28 = arith.mulf %19, %27 : vector<8x128xf32>
    %c0_14 = arith.constant 0 : index
    %c0_15 = arith.constant 0 : index
    %29 = vector.load %arg6[%c0_14, %c0_15] : memref<8x128xf32, #tpu.memory_space<vmem>>, vector<8x128xf32>
    tpu.vector_store %arg6[%c0_14, %c0_15], %28 {strides = array<i32>} : memref<8x128xf32, #tpu.memory_space<vmem>>, vector<8x128xf32>,
    return
  }
  func.func @transform_0(%arg0: i32) -> (i32, i32) {
    %c0_i32 = arith.constant 0 : i32
    %c0_i32_0 = arith.constant 0 : i32
    return %arg0, %c0_i32 : i32, i32
  }
  func.func @transform_1(%arg0: i32) -> (i32, i32) {
    %c0_i32 = arith.constant 0 : i32
    %c0_i32_0 = arith.constant 0 : i32
    %c0_i32_1 = arith.constant 0 : i32
    return %c0_i32, %c0_i32_0 : i32, i32
  }
  func.func @transform_2(%arg0: i32) -> (i32, i32) {
    %c0_i32 = arith.constant 0 : i32
    %c0_i32_0 = arith.constant 0 : i32
    %c0_i32_1 = arith.constant 0 : i32
    return %c0_i32, %c0_i32_0 : i32, i32
  }
  func.func @transform_3(%arg0: i32) -> (i32, i32) {
    %c0_i32 = arith.constant 0 : i32
    %c0_i32_0 = arith.constant 0 : i32
    %c0_i32_1 = arith.constant 0 : i32
    return %c0_i32, %c0_i32_0 : i32, i32
  }
  func.func @transform_4(%arg0: i32) -> (i32, i32) {
    %c0_i32 = arith.constant 0 : i32
    %c0_i32_0 = arith.constant 0 : i32
    %c0_i32_1 = arith.constant 0 : i32
    return %c0_i32, %c0_i32_0 : i32, i32
  }
  func.func @transform_5(%arg0: i32) -> (i32, i32) {
    %c0_i32 = arith.constant 0 : i32
    %c0_i32_0 = arith.constant 0 : i32
    return %arg0, %c0_i32 : i32, i32
  }
}

</mosaic_0001>

<llo_original>
// kernel: tpu_custom_call.1
$region0: #{tpu_custom_call.1}
  #allocation0 [shape = 'u32[]', space=smem, size = 0x4, offset = 0x4, fixed_abs, tag = 'smem constant byte address 0x4 - core index']
  #allocation1 [shape = 'u32[144,128]{1,0:T(1,128)}', space=vmem, size = 0x12000, scoped, tag = 'internal scratch']
  %s0 = inlined_call_operand.hbm [shape: f32[8,16], index: 0, kind: input, shape index: {}]
  %s1 = inlined_call_operand.hbm [shape: bf16[16,128], index: 1, kind: input, shape index: {}]
  %s2 = inlined_call_operand.vmem [shape: f32[1,128], index: 2, kind: input, shape index: {}]
  %s3 = inlined_call_operand.hbm [shape: bf16[128,128], index: 3, kind: input, shape index: {}]
  %s4 = inlined_call_operand.vmem [shape: f32[1,128], index: 4, kind: input, shape index: {}]
  %s5 = inlined_call_operand.hbm [shape: f32[8,128], index: 5, kind: output, shape index: {}]
  %s6 = sld [smem:[#allocation0]]
  $region42: #{tpu_custom_call.1} parent=0
    _
  %s8 = ssub.s32 1, %s6
  %s9 = scalar_select 0, %s8, %s6
  $region1: #{tpu_custom_call.1} parent=0
    #allocation2 [shape = 'u8[4096]{0}', space=vmem, size = 0x1000, scoped, tag = 'input window, operand 0, single buffered']
    #allocation3 [shape = 's32[1]{0}', space=sflag, size = 0x4, scoped, tag = 'scoped memory for tpu_custom_call.1']
    #allocation4 [shape = 's32[1]{0}', space=sflag, size = 0x4, scoped, tag = 'scoped memory for tpu_custom_call.1']
    #allocation5 [shape = 'u8[4096]{0}', space=vmem, size = 0x1000, scoped, tag = 'input window, operand 1, single buffered']
    #allocation6 [shape = 's32[1]{0}', space=sflag, size = 0x4, scoped, tag = 'scoped memory for tpu_custom_call.1']
    #allocation7 [shape = 'u8[32768]{0}', space=vmem, size = 0x8000, scoped, tag = 'input window, operand 3, single buffered']
    #allocation8 [shape = 'u8[4096]{0}', space=vmem, size = 0x1000, scoped, tag = 'output window, operand 0, single buffered']
    %10 = vsyncpa [#allocation3], 0
    %11 = vsyncpa [#allocation6], 0
    %12 = vsyncpa [#allocation4], 0
    // Predicated region
    $region2: #{tpu_custom_call.1} parent=1 // pred_check
      _
    $region3: #{tpu_custom_call.1} parent=1 // pred_check_branch
      %14 = sbr.rel (0) target = $region5
    $region4: #{tpu_custom_call.1} parent=1 // pred_region
      %s16 = ssub.s32 128, 128
      %17 = vsyncadd [#allocation3], %s16
      %s19 = sshll.u32 [#allocation2], 4
      %s20 = int_to_ptr.vmem [resolvable:$true] %s19
      %22 = dma.hbm_to_vmem [thread:$0]  %s0, 128, %s20, [#allocation3]
    $region5: #{tpu_custom_call.1} parent=1 // pred_fallthru
      _
    // Predicated region
    $region6: #{tpu_custom_call.1} parent=1 // pred_check
      _
    $region7: #{tpu_custom_call.1} parent=1 // pred_check_branch
      %24 = sbr.rel (0) target = $region9
    $region8: #{tpu_custom_call.1} parent=1 // pred_region
      %s26 = ssub.s32 128, 128
      %27 = vsyncadd [#allocation6], %s26
      %s28 = sshll.u32 [#allocation5], 4
      %s29 = int_to_ptr.vmem [resolvable:$true] %s28
      %34 = dma.hbm_to_vmem [thread:$0]  %s1, 128, %s29, [#allocation6], 64, 64, 4
    $region9: #{tpu_custom_call.1} parent=1 // pred_fallthru
      _
    // Predicated region
    $region10: #{tpu_custom_call.1} parent=1 // pred_check
      _
    $region11: #{tpu_custom_call.1} parent=1 // pred_check_branch
      %36 = sbr.rel (0) target = $region13
    $region12: #{tpu_custom_call.1} parent=1 // pred_region
      _
    $region13: #{tpu_custom_call.1} parent=1 // pred_fallthru
      _
    // Predicated region
    $region14: #{tpu_custom_call.1} parent=1 // pred_check
      _
    $region15: #{tpu_custom_call.1} parent=1 // pred_check_branch
      %38 = sbr.rel (0) target = $region17
    $region16: #{tpu_custom_call.1} parent=1 // pred_region
      %s40 = ssub.s32 1024, 1024
      %41 = vsyncadd [#allocation6], %s40
      %s42 = sshll.u32 [#allocation7], 4
      %s43 = int_to_ptr.vmem [resolvable:$true] %s42
      %48 = dma.hbm_to_vmem [thread:$0]  %s3, 1024, %s43, [#allocation6], 64, 64, 4
    $region17: #{tpu_custom_call.1} parent=1 // pred_fallthru
      _
    // Predicated region
    $region18: #{tpu_custom_call.1} parent=1 // pred_check
      _
    $region19: #{tpu_custom_call.1} parent=1 // pred_check_branch
      %50 = sbr.rel (0) target = $region21
    $region20: #{tpu_custom_call.1} parent=1 // pred_region
      _
    $region21: #{tpu_custom_call.1} parent=1 // pred_fallthru
      _
    // Predicated region
    $region22: #{tpu_custom_call.1} parent=1 // pred_check
      _
    $region23: #{tpu_custom_call.1} parent=1 // pred_check_branch
      %52 = sbr.rel (0) target = $region25
    $region24: #{tpu_custom_call.1} parent=1 // pred_region
      %53 = dma.done [#allocation3], 128
    $region25: #{tpu_custom_call.1} parent=1 // pred_fallthru
      _
    // Predicated region
    $region26: #{tpu_custom_call.1} parent=1 // pred_check
      _
    $region27: #{tpu_custom_call.1} parent=1 // pred_check_branch
      %55 = sbr.rel (0) target = $region29
    $region28: #{tpu_custom_call.1} parent=1 // pred_region
      %56 = dma.done [#allocation6], 128
    $region29: #{tpu_custom_call.1} parent=1 // pred_fallthru
      _
    // Predicated region
    $region30: #{tpu_custom_call.1} parent=1 // pred_check
      _
    $region31: #{tpu_custom_call.1} parent=1 // pred_check_branch
      %58 = sbr.rel (0) target = $region33
    $region32: #{tpu_custom_call.1} parent=1 // pred_region
      %59 = dma.done [#allocation6], 1024
    $region33: #{tpu_custom_call.1} parent=1 // pred_fallthru
      _
    %v61 = vld [vmem:[#allocation2] sm:$0xff]
    %v62 = vpack.c.bf16 %v61, %v61
    %v63 = vld [vmem:[#allocation5] sm:$0xf]
    %v64 = vld [vmem:[#allocation5 + $0x4] sm:$0xf]
    %v65 = vld [vmem:[%s2] sm:$0x1]
    %v67 = vlaneseq
    %v68 = vshrl.u32 %v67, 7
    %v69 = vsub.s32 0, %v68
    %v70 = vrot.slane %v65, %v69
    %v74 = vunpack.c.l.b16 %v63
    %v75 = vunpack.c.l.b16 %v64
    %v76 = vpack.c.b16 %v75, %v74
    %vm78 = vcmask 130048
    %v80 = vsel %vm78, %v62, 0
    %82 = vmatprep.subr.bf16.mxu0 0
    %83 = vmatpush1.bf16.msra.mxu0 %v76
    %84 = vmatprep.subr.bf16.mxu0 0
    %85 = vmatpush1.bf16.msra.mxu0 0
    %86 = vmatprep.subr.bf16.mxu0 0
    %87 = vmatpush1.bf16.msra.mxu0 0
    %88 = vmatprep.subr.bf16.mxu0 0
    %89 = vmatpush1.bf16.msra.mxu0 0
    %90 = vmatprep.subr.bf16.mxu0 0
    %91 = vmatpush1.bf16.msra.mxu0 0
    %92 = vmatprep.subr.bf16.mxu0 0
    %93 = vmatpush1.bf16.msra.mxu0 0
    %94 = vmatprep.subr.bf16.mxu0 0
    %95 = vmatpush1.bf16.msra.mxu0 0
    %96 = vmatprep.subr.bf16.mxu0 0
    %97 = vmatpush1.bf16.msra.mxu0 0
    %98 = vmatprep.subr.bf16.mxu0 0
    %99 = vmatpush1.bf16.msra.mxu0 0
    %100 = vmatprep.subr.bf16.mxu0 0
    %101 = vmatpush1.bf16.msra.mxu0 0
    %102 = vmatprep.subr.bf16.mxu0 0
    %103 = vmatpush1.bf16.msra.mxu0 0
    %104 = vmatprep.subr.bf16.mxu0 0
    %105 = vmatpush1.bf16.msra.mxu0 0
    %106 = vmatprep.subr.bf16.mxu0 0
    %107 = vmatpush1.bf16.msra.mxu0 0
    %108 = vmatprep.subr.bf16.mxu0 0
    %109 = vmatpush1.bf16.msra.mxu0 0
    %110 = vmatprep.subr.bf16.mxu0 0
    %111 = vmatpush1.bf16.msra.mxu0 0
    %112 = vmatprep.subr.bf16.mxu0 0
    %113 = vmatpush1.bf16.msra.mxu0 0
    %114 = vmatprep.mubr.bf16.mxu0 0
    %115 = vmatmul.mubr.bf16.gmra.mrb[0].mxu0 %v80
    %v116 = vpop.f32.mrb[0].mxu0
    %v117 = vadd.f32 %v70, %v116
    %v118 = vpop.f32.mrb[0].mxu0
    %v119 = vpop.f32.mrb[0].mxu0
    %v120 = vpop.f32.mrb[0].mxu0
    %121 = vdwg.mxu0
    %v122 = vmax.f32 %v117, 0.0
    %v123 = vpack.c.bf16 %v122, %v122
    %v124 = vld [vmem:[#allocation7] sm:$0xf]
    %v125 = vld [vmem:[#allocation7 + $0x4] sm:$0xf]
    %v126 = vld [vmem:[#allocation7 + $0x8] sm:$0xf]
    %v127 = vld [vmem:[#allocation7 + $0xc] sm:$0xf]
    %v128 = vld [vmem:[#allocation7 + $0x10] sm:$0xf]
    %v129 = vld [vmem:[#allocation7 + $0x14] sm:$0xf]
    %v130 = vld [vmem:[#allocation7 + $0x18] sm:$0xf]
    %v131 = vld [vmem:[#allocation7 + $0x1c] sm:$0xf]
    %v132 = vld [vmem:[#allocation7 + $0x20] sm:$0xf]
    %v133 = vld [vmem:[#allocation7 + $0x24] sm:$0xf]
    %v134 = vld [vmem:[#allocation7 + $0x28] sm:$0xf]
    %v135 = vld [vmem:[#allocation7 + $0x2c] sm:$0xf]
    %v136 = vld [vmem:[#allocation7 + $0x30] sm:$0xf]
    %v137 = vld [vmem:[#allocation7 + $0x34] sm:$0xf]
    %v138 = vld [vmem:[#allocation7 + $0x38] sm:$0xf]
    %v139 = vld [vmem:[#allocation7 + $0x3c] sm:$0xf]
    %v140 = vld [vmem:[%s4] sm:$0x1]
    %v142 = vlaneseq
    %v143 = vshrl.u32 %v142, 7
    %v144 = vsub.s32 0, %v143
    %v145 = vrot.slane %v140, %v144
    %v163 = vunpack.c.l.b16 %v124
    %v164 = vunpack.c.l.b16 %v125
    %v165 = vunpack.c.l.b16 %v126
    %v166 = vunpack.c.l.b16 %v127
    %v167 = vunpack.c.l.b16 %v128
    %v168 = vunpack.c.l.b16 %v129
    %v169 = vunpack.c.l.b16 %v130
    %v170 = vunpack.c.l.b16 %v131
    %v171 = vunpack.c.l.b16 %v132
    %v172 = vunpack.c.l.b16 %v133
    %v173 = vunpack.c.l.b16 %v134
    %v174 = vunpack.c.l.b16 %v135
    %v175 = vunpack.c.l.b16 %v136
    %v176 = vunpack.c.l.b16 %v137
    %v177 = vunpack.c.l.b16 %v138
    %v178 = vunpack.c.l.b16 %v139
    %v179 = vpack.c.b16 %v164, %v163
    %v180 = vpack.c.b16 %v166, %v165
    %v181 = vpack.c.b16 %v168, %v167
    %v182 = vpack.c.b16 %v170, %v169
    %v183 = vpack.c.b16 %v172, %v171
    %v184 = vpack.c.b16 %v174, %v173
    %v185 = vpack.c.b16 %v176, %v175
    %v186 = vpack.c.b16 %v178, %v177
    %195 = vmatprep.subr.bf16.mxu0 0
    %196 = vmatpush1.bf16.msra.mxu0 %v179
    %197 = vmatprep.subr.bf16.mxu0 0
    %198 = vmatpush1.bf16.msra.mxu0 %v180
    %199 = vmatprep.subr.bf16.mxu0 0
    %200 = vmatpush1.bf16.msra.mxu0 %v181
    %201 = vmatprep.subr.bf16.mxu0 0
    %202 = vmatpush1.bf16.msra.mxu0 %v182
    %203 = vmatprep.subr.bf16.mxu0 0
    %204 = vmatpush1.bf16.msra.mxu0 %v183
    %205 = vmatprep.subr.bf16.mxu0 0
    %206 = vmatpush1.bf16.msra.mxu0 %v184
    %207 = vmatprep.subr.bf16.mxu0 0
    %208 = vmatpush1.bf16.msra.mxu0 %v185
    %209 = vmatprep.subr.bf16.mxu0 0
    %210 = vmatpush1.bf16.msra.mxu0 %v186
    %211 = vmatprep.subr.bf16.mxu0 0
    %212 = vmatpush1.bf16.msra.mxu0 0
    %213 = vmatprep.subr.bf16.mxu0 0
    %214 = vmatpush1.bf16.msra.mxu0 0
    %215 = vmatprep.subr.bf16.mxu0 0
    %216 = vmatpush1.bf16.msra.mxu0 0
    %217 = vmatprep.subr.bf16.mxu0 0
    %218 = vmatpush1.bf16.msra.mxu0 0
    %219 = vmatprep.subr.bf16.mxu0 0
    %220 = vmatpush1.bf16.msra.mxu0 0
    %221 = vmatprep.subr.bf16.mxu0 0
    %222 = vmatpush1.bf16.msra.mxu0 0
    %223 = vmatprep.subr.bf16.mxu0 0
    %224 = vmatpush1.bf16.msra.mxu0 0
    %225 = vmatprep.subr.bf16.mxu0 0
    %226 = vmatpush1.bf16.msra.mxu0 0
    %227 = vmatprep.mubr.bf16.mxu0 0
    %228 = vmatmul.mubr.bf16.gmra.mrb[0].mxu0 %v123
    %v229 = vpop.f32.mrb[0].mxu0
    %v230 = vadd.f32 %v145, %v229
    %v231 = vpop.f32.mrb[0].mxu0
    %v232 = vpop.f32.mrb[0].mxu0
    %v233 = vpop.f32.mrb[0].mxu0
    %234 = vdwg.mxu0
    %235 = vmax.xlane.f32.xlu0 %v230
    %v236 = vpop.xlane.xlu0 %235
    %v237 = vsub.f32 %v230, %v236
    %v238 = vmul.f32 %v237, 1.442695
    %v239 = vpow.pop %v238
    %240 = vadd.xlane.f32.xlu0 %v239
    %v241 = vpop.xlane.xlu0 %240
    %v242 = vrcp.pop %v241
    %v243 = vmul.f32 %v241, %v242
    %v244 = vsub.f32 2.0, %v243
    %v245 = vmul.f32 %v242, %v244
    %v246 = vmul.f32 %v239, %v245
    %247 = vst [vmem:[#allocation8] sm:$0xff] %v246
    // Predicated region
    $region34: #{tpu_custom_call.1} parent=1 // pred_check
      _
    $region35: #{tpu_custom_call.1} parent=1 // pred_check_branch
      %249 = sbr.rel (0) target = $region37
    $region36: #{tpu_custom_call.1} parent=1 // pred_region
      %s251 = ssub.s32 128, 128
      %252 = vsyncadd [#allocation4], %s251
      %s254 = sshll.u32 [#allocation8], 4
      %s255 = int_to_ptr.vmem [resolvable:$true] %s254
      %257 = dma.vmem_to_hbm [thread:$0]  %s255, 128, %s5, [#allocation4]
    $region37: #{tpu_custom_call.1} parent=1 // pred_fallthru
      _
    // Predicated region
    $region38: #{tpu_custom_call.1} parent=1 // pred_check
      _
    $region39: #{tpu_custom_call.1} parent=1 // pred_check_branch
      %259 = sbr.rel (0) target = $region41
    $region40: #{tpu_custom_call.1} parent=1 // pred_region
      %260 = dma.done [#allocation4], 128
    $region41: #{tpu_custom_call.1} parent=1 // pred_fallthru
      _
    %261 = vsyncpa [#allocation3], 1
    %262 = vsyncpa [#allocation6], 1
    %263 = vsyncpa [#allocation4], 1

</llo_original>
